<compile_context>
chip_gen: v6e
topology: v6e:2x2x1
jax: 0.10.0
libtpu: 0.0.40
codegen_flags: <defaults>
</compile_context>

<pallas_src>
import functools

import jax
import jax.numpy as jnp
from jax.experimental import pallas as pl
from jax.experimental.pallas import tpu as pltpu


# ----------------------------------------------------------------------------
# NTU-RGB+D 25-joint skeleton partitioned into 3 body parts (body / arm / leg)
# ----------------------------------------------------------------------------
LISTE_MEMBRE = [
    [0, 1, 20, 2, 3],                                  # body (torso + head)
    [4, 5, 6, 7, 21, 22, 8, 9, 10, 11, 23, 24],        # arms
    [12, 13, 14, 15, 16, 17, 18, 19],                  # legs
]
N_JOINTS = 25
C_OUT = N_JOINTS * 3   # 75
N_PARTS = len(LISTE_MEMBRE)


def transfo_inverse_NTU(x, joint_ids):
    """Gather joint subset: (B, T, 75) -> (B, T, len(joint_ids)*3). (ref path)"""
    if x is None:
        return None
    B, T, _ = x.shape
    xprime = x.reshape(B, T, N_JOINTS, 3)
    xprime = xprime[:, :, jnp.asarray(joint_ids, dtype=jnp.int32), :]
    return xprime.reshape(B, T, len(joint_ids) * 3)


def _part_channel_idx(joint_ids):
    """Flat channel indices of a body part inside the 75-wide skeleton vector."""
    return jnp.asarray([3 * j + d for j in joint_ids for d in range(3)],
                       dtype=jnp.int32)


# ----------------------------------------------------------------------------
# Raw (per-part) surrogate parameters — identical to the previous version so
# the pure-JAX reference stays the same.
# ----------------------------------------------------------------------------
def init_params(key, seq_len, dec_len, pred_len):
    all_params = []
    for joint_ids in LISTE_MEMBRE:
        C = len(joint_ids) * 3
        key, k1, k2, k3, k4, k5 = jax.random.split(key, 6)
        s = 0.1
        params = (
            s * jax.random.normal(k1, (pred_len, seq_len), jnp.float32),   # Wt_enc
            s * jax.random.normal(k2, (pred_len, dec_len), jnp.float32),   # Wt_dec
            s * jax.random.normal(k3, (C, C), jnp.float32),                # Wc_enc
            s * jax.random.normal(k4, (C, C), jnp.float32),                # Wc_dec
            s * jax.random.normal(k5, (1, C), jnp.float32),                # bias
        )
        all_params.append(params)
    return all_params


# ----------------------------------------------------------------------------
# Init-time fusion.
#
#   wt_e : (3*B*Pp, B*T_enc)  block (part k, batch b) at rows
#          [k*B*Pp + b*Pp, ... + pred_len), cols [b*T_enc, (b+1)*T_enc).
#          Block-diagonal over batch -> one matmul covers every batch.
#   wt_d : (3*B*Pp, B*T_dec)  same layout for the decoder stream.
#   a_all: (6, 75, 75) scatter-extended channel mixes (gather + Wc + scatter),
#          order [enc_0, enc_1, enc_2, dec_0, dec_1, dec_2].
#   bias : (B*Pp, 75) scattered bias pre-placed at the rows the kernel reads.
# ----------------------------------------------------------------------------
def fuse_params(params, seq_len, dec_len, pred_len, batch):
    C = C_OUT
    pp = ((pred_len + 7) // 8) * 8                     # sublane-aligned rows/batch
    rows = batch * pp

    wt_e = jnp.zeros((N_PARTS * rows, batch * seq_len), jnp.float32)
    wt_d = jnp.zeros((N_PARTS * rows, batch * dec_len), jnp.float32)
    bias_acc = jnp.zeros((rows, C), jnp.float32)
    a_list = [None] * (2 * N_PARTS)

    for k, joint_ids in enumerate(LISTE_MEMBRE):
        idx = _part_channel_idx(joint_ids)
        wt_enc, wt_dec, wc_enc, wc_dec, bias = params[k]

        a_list[k] = jnp.zeros((C, C), jnp.float32).at[
            idx[:, None], idx[None, :]].set(wc_enc)
        a_list[N_PARTS + k] = jnp.zeros((C, C), jnp.float32).at[
            idx[:, None], idx[None, :]].set(wc_dec)

        sb = jnp.zeros((C,), jnp.float32).at[idx].set(bias[0])

        for b in range(batch):
            r0 = k * rows + b * pp
            wt_e = wt_e.at[r0:r0 + pred_len,
                           b * seq_len:(b + 1) * seq_len].set(wt_enc)
            wt_d = wt_d.at[r0:r0 + pred_len,
                           b * dec_len:(b + 1) * dec_len].set(wt_dec)
            bias_acc = bias_acc.at[b * pp:b * pp + pred_len, :].add(sb[None, :])

    a_all = jnp.stack(a_list, axis=0)                  # (6, 75, 75)
    return wt_e, wt_d, a_all, bias_acc


# ----------------------------------------------------------------------------
# Single fused, ungridded Pallas kernel (8 MXU ops total):
#   te = WT_e_big @ x_enc_flat        (3*B*Pp, 75)   1 matmul (all batches)
#   td = WT_d_big @ x_dec_flat        (3*B*Pp, 75)   1 matmul (all batches)
#   acc = bias + sum_k te[k] @ A_enc_k + td[k] @ A_dec_k     6 matmuls
#   y[b] = acc[b*Pp : b*Pp + pred_len]                stored per batch
# ----------------------------------------------------------------------------
def _fused_kernel(xe_ref, xd_ref, wte_ref, wtd_ref, a_ref, bias_ref, o_ref):
    B = o_ref.shape[0]
    pred_len = o_ref.shape[1]
    rows = bias_ref.shape[0]          # B * Pp
    pp = rows // B

    xe = xe_ref[...]                  # (B*T_enc, 75)
    xd = xd_ref[...]                  # (B*T_dec, 75)

    # Batch-block-diagonal time projections (batch stacked along M and K).
    te = jnp.dot(wte_ref[...], xe, preferred_element_type=jnp.float32)
    td = jnp.dot(wtd_ref[...], xd, preferred_element_type=jnp.float32)

    # Gather/scatter-folded channel mixes, accumulated; bias pre-placed.
    acc = bias_ref[...]               # (B*Pp, 75)
    for k in range(N_PARTS):          # static unroll over 3 parts x 2 streams
        acc = acc + jnp.dot(te[k * rows:(k + 1) * rows, :], a_ref[k],
                            preferred_element_type=jnp.float32)
        acc = acc + jnp.dot(td[k * rows:(k + 1) * rows, :], a_ref[N_PARTS + k],
                            preferred_element_type=jnp.float32)

    for b in range(B):                # B is tiny; 8-aligned sublane slices
        o_ref[b] = acc[b * pp:b * pp + pred_len, :]


# ----------------------------------------------------------------------------
# Forward: free reshapes + one pallas_call.  No concat / pad / slice launches.
# ----------------------------------------------------------------------------
def model_forward(fused_params, pred_len, x_enc, x_mark_enc, x_dec, x_mark_dec,
                  mask=None):
    # x_mark_enc / x_mark_dec / mask are unused by the linear surrogate
    # (the original wrapper forwards them to FEDformer sub-models).
    del x_mark_enc, x_mark_dec, mask

    wt_e, wt_d, a_all, bias_acc = fused_params
    B, T_enc, C = x_enc.shape
    T_dec = x_dec.shape[1]
    assert C == C_OUT
    assert wt_e.shape[1] == B * T_enc and wt_d.shape[1] == B * T_dec, (
        "fused params were built for different batch / sequence lengths")
    rows = bias_acc.shape[0]          # B * Pp

    xe = x_enc.reshape(B * T_enc, C)  # contiguous reshape -> free bitcast
    xd = x_dec.reshape(B * T_dec, C)

    flops = 2 * (wt_e.shape[0] * wt_e.shape[1] * C
                 + wt_d.shape[0] * wt_d.shape[1] * C
                 + 2 * N_PARTS * rows * C * C)
    bytes_accessed = 4 * (xe.size + xd.size + wt_e.size + wt_d.size
                          + a_all.size + bias_acc.size + B * pred_len * C)

    out = pl.pallas_call(
        _fused_kernel,
        out_shape=jax.ShapeDtypeStruct((B, pred_len, C), jnp.float32),
        in_specs=[pl.BlockSpec(memory_space=pltpu.MemorySpace.VMEM)
                  for _ in range(6)],
        out_specs=pl.BlockSpec(memory_space=pltpu.MemorySpace.VMEM),
        cost_estimate=pl.CostEstimate(flops=flops, transcendentals=0,
                                      bytes_accessed=bytes_accessed),
    )(xe, xd, wt_e, wt_d, a_all, bias_acc)
    return out


# ----------------------------------------------------------------------------
# Pure-JAX reference (unchanged): explicit gather -> per-part model -> scatter.
# ----------------------------------------------------------------------------
def model_forward_ref(params, pred_len, x_enc, x_mark_enc, x_dec, x_mark_dec):
    B = x_enc.shape[0]
    y = jnp.zeros((B, pred_len, N_JOINTS, 3), dtype=jnp.float32)
    for k, joint_ids in enumerate(LISTE_MEMBRE):
        xe = transfo_inverse_NTU(x_enc, joint_ids)
        xd = transfo_inverse_NTU(x_dec, joint_ids)
        wt_enc, wt_dec, wc_enc, wc_dec, bias = params[k]
        ye = jnp.einsum("pt,btc,cd->bpd", wt_enc, xe, wc_enc)
        yd = jnp.einsum("pt,btc,cd->bpd", wt_dec, xd, wc_dec)
        yk = (ye + yd + bias[None]).reshape(B, pred_len, len(joint_ids), 3)
        y = y.at[:, :, jnp.asarray(joint_ids, dtype=jnp.int32), :].set(yk)
    return y.reshape(B, pred_len, C_OUT)


if __name__ == "__main__":
    # Small shapes consistent with the module's forward.
    B = 2
    seq_len = 8
    label_len = 4
    pred_len = 4
    dec_len = label_len + pred_len

    key = jax.random.PRNGKey(0)
    kp, k1, k2, k3, k4 = jax.random.split(key, 5)

    params = init_params(kp, seq_len, dec_len, pred_len)
    fused = fuse_params(params, seq_len, dec_len, pred_len, batch=B)

    x_enc = jax.random.normal(k1, (B, seq_len, C_OUT), jnp.float32)
    x_mark_enc = jax.random.normal(k2, (B, seq_len, C_OUT), jnp.float32)
    x_dec = jax.random.normal(k3, (B, dec_len, C_OUT), jnp.float32)
    x_mark_dec = jax.random.normal(k4, (B, dec_len, C_OUT), jnp.float32)

    fwd = jax.jit(functools.partial(model_forward, fused, pred_len))
    y = fwd(x_enc, x_mark_enc, x_dec, x_mark_dec)
    y = jax.block_until_ready(y)

    assert y.shape == (B, pred_len, C_OUT), y.shape

    y_ref = model_forward_ref(params, pred_len, x_enc, x_mark_enc, x_dec,
                              x_mark_dec)
    assert jnp.allclose(y, y_ref, atol=1e-4, rtol=1e-4), "mismatch vs reference"

    print("KERNEL_OK")
</pallas_src>

<mosaic_0001>
module attributes {stable_mosaic.version = 11 : i64} {
  func.func @_fused_kernel(%arg0: memref<16x75xf32, #tpu.memory_space<vmem>>, %arg1: memref<16x75xf32, #tpu.memory_space<vmem>>, %arg2: memref<48x16xf32, #tpu.memory_space<vmem>>, %arg3: memref<48x16xf32, #tpu.memory_space<vmem>>, %arg4: memref<6x75x75xf32, #tpu.memory_space<vmem>>, %arg5: memref<16x75xf32, #tpu.memory_space<vmem>>, %arg6: memref<2x4x75xf32, #tpu.memory_space<vmem>>) attributes {dimension_semantics = [], scalar_prefetch = 0 : i64, scratch_operands = 0 : i64, tpu.core_type = #tpu.core_type<tc>} {
    %c0 = arith.constant 0 : index
    %c0_0 = arith.constant 0 : index
    %0 = vector.load %arg0[%c0, %c0_0] : memref<16x75xf32, #tpu.memory_space<vmem>>, vector<16x75xf32>
    %c0_1 = arith.constant 0 : index
    %c0_2 = arith.constant 0 : index
    %1 = vector.load %arg1[%c0_1, %c0_2] : memref<16x75xf32, #tpu.memory_space<vmem>>, vector<16x75xf32>
    %c0_3 = arith.constant 0 : index
    %c0_4 = arith.constant 0 : index
    %2 = vector.load %arg2[%c0_3, %c0_4] : memref<48x16xf32, #tpu.memory_space<vmem>>, vector<48x16xf32>
    %cst = arith.constant dense<0.000000e+00> : vector<48x75xf32>
    %3 = tpu.matmul %2, %0, %cst {dimension_numbers = #tpu.dot_dimension_numbers<[1], [0], [0], [1], [0, 0, 1, 1], [], []>} : vector<48x16xf32>, vector<16x75xf32>, vector<48x75xf32> -> vector<48x75xf32>
    %c0_5 = arith.constant 0 : index
    %c0_6 = arith.constant 0 : index
    %4 = vector.load %arg3[%c0_5, %c0_6] : memref<48x16xf32, #tpu.memory_space<vmem>>, vector<48x16xf32>
    %cst_7 = arith.constant dense<0.000000e+00> : vector<48x75xf32>
    %5 = tpu.matmul %4, %1, %cst_7 {dimension_numbers = #tpu.dot_dimension_numbers<[1], [0], [0], [1], [0, 0, 1, 1], [], []>} : vector<48x16xf32>, vector<16x75xf32>, vector<48x75xf32> -> vector<48x75xf32>
    %c0_8 = arith.constant 0 : index
    %c0_9 = arith.constant 0 : index
    %6 = vector.load %arg5[%c0_8, %c0_9] : memref<16x75xf32, #tpu.memory_space<vmem>>, vector<16x75xf32>
    %7 = vector.extract_strided_slice %3 {offsets = [0, 0], sizes = [16, 75], strides = [1, 1]} : vector<48x75xf32> to vector<16x75xf32>
    %c0_10 = arith.constant 0 : index
    %c0_11 = arith.constant 0 : index
    %c0_12 = arith.constant 0 : index
    %8 = vector.load %arg4[%c0_10, %c0_11, %c0_12] : memref<6x75x75xf32, #tpu.memory_space<vmem>>, vector<1x75x75xf32>
    %9 = vector.shape_cast %8 : vector<1x75x75xf32> to vector<75x75xf32>
    %cst_13 = arith.constant dense<0.000000e+00> : vector<16x75xf32>
    %10 = tpu.matmul %7, %9, %cst_13 {dimension_numbers = #tpu.dot_dimension_numbers<[1], [0], [0], [1], [0, 0, 1, 1], [], []>} : vector<16x75xf32>, vector<75x75xf32>, vector<16x75xf32> -> vector<16x75xf32>
    %11 = arith.addf %6, %10 : vector<16x75xf32>
    %12 = vector.extract_strided_slice %5 {offsets = [0, 0], sizes = [16, 75], strides = [1, 1]} : vector<48x75xf32> to vector<16x75xf32>
    %c3 = arith.constant 3 : index
    %c0_14 = arith.constant 0 : index
    %c0_15 = arith.constant 0 : index
    %13 = vector.load %arg4[%c3, %c0_14, %c0_15] : memref<6x75x75xf32, #tpu.memory_space<vmem>>, vector<1x75x75xf32>
    %14 = vector.shape_cast %13 : vector<1x75x75xf32> to vector<75x75xf32>
    %cst_16 = arith.constant dense<0.000000e+00> : vector<16x75xf32>
    %15 = tpu.matmul %12, %14, %cst_16 {dimension_numbers = #tpu.dot_dimension_numbers<[1], [0], [0], [1], [0, 0, 1, 1], [], []>} : vector<16x75xf32>, vector<75x75xf32>, vector<16x75xf32> -> vector<16x75xf32>
    %16 = arith.addf %11, %15 : vector<16x75xf32>
    %17 = vector.extract_strided_slice %3 {offsets = [16, 0], sizes = [16, 75], strides = [1, 1]} : vector<48x75xf32> to vector<16x75xf32>
    %c1 = arith.constant 1 : index
    %c0_17 = arith.constant 0 : index
    %c0_18 = arith.constant 0 : index
    %18 = vector.load %arg4[%c1, %c0_17, %c0_18] : memref<6x75x75xf32, #tpu.memory_space<vmem>>, vector<1x75x75xf32>
    %19 = vector.shape_cast %18 : vector<1x75x75xf32> to vector<75x75xf32>
    %cst_19 = arith.constant dense<0.000000e+00> : vector<16x75xf32>
    %20 = tpu.matmul %17, %19, %cst_19 {dimension_numbers = #tpu.dot_dimension_numbers<[1], [0], [0], [1], [0, 0, 1, 1], [], []>} : vector<16x75xf32>, vector<75x75xf32>, vector<16x75xf32> -> vector<16x75xf32>
    %21 = arith.addf %16, %20 : vector<16x75xf32>
    %22 = vector.extract_strided_slice %5 {offsets = [16, 0], sizes = [16, 75], strides = [1, 1]} : vector<48x75xf32> to vector<16x75xf32>
    %c4 = arith.constant 4 : index
    %c0_20 = arith.constant 0 : index
    %c0_21 = arith.constant 0 : index
    %23 = vector.load %arg4[%c4, %c0_20, %c0_21] : memref<6x75x75xf32, #tpu.memory_space<vmem>>, vector<1x75x75xf32>
    %24 = vector.shape_cast %23 : vector<1x75x75xf32> to vector<75x75xf32>
    %cst_22 = arith.constant dense<0.000000e+00> : vector<16x75xf32>
    %25 = tpu.matmul %22, %24, %cst_22 {dimension_numbers = #tpu.dot_dimension_numbers<[1], [0], [0], [1], [0, 0, 1, 1], [], []>} : vector<16x75xf32>, vector<75x75xf32>, vector<16x75xf32> -> vector<16x75xf32>
    %26 = arith.addf %21, %25 : vector<16x75xf32>
    %27 = vector.extract_strided_slice %3 {offsets = [32, 0], sizes = [16, 75], strides = [1, 1]} : vector<48x75xf32> to vector<16x75xf32>
    %c2 = arith.constant 2 : index
    %c0_23 = arith.constant 0 : index
    %c0_24 = arith.constant 0 : index
    %28 = vector.load %arg4[%c2, %c0_23, %c0_24] : memref<6x75x75xf32, #tpu.memory_space<vmem>>, vector<1x75x75xf32>
    %29 = vector.shape_cast %28 : vector<1x75x75xf32> to vector<75x75xf32>
    %cst_25 = arith.constant dense<0.000000e+00> : vector<16x75xf32>
    %30 = tpu.matmul %27, %29, %cst_25 {dimension_numbers = #tpu.dot_dimension_numbers<[1], [0], [0], [1], [0, 0, 1, 1], [], []>} : vector<16x75xf32>, vector<75x75xf32>, vector<16x75xf32> -> vector<16x75xf32>
    %31 = arith.addf %26, %30 : vector<16x75xf32>
    %32 = vector.extract_strided_slice %5 {offsets = [32, 0], sizes = [16, 75], strides = [1, 1]} : vector<48x75xf32> to vector<16x75xf32>
    %c5 = arith.constant 5 : index
    %c0_26 = arith.constant 0 : index
    %c0_27 = arith.constant 0 : index
    %33 = vector.load %arg4[%c5, %c0_26, %c0_27] : memref<6x75x75xf32, #tpu.memory_space<vmem>>, vector<1x75x75xf32>
    %34 = vector.shape_cast %33 : vector<1x75x75xf32> to vector<75x75xf32>
    %cst_28 = arith.constant dense<0.000000e+00> : vector<16x75xf32>
    %35 = tpu.matmul %32, %34, %cst_28 {dimension_numbers = #tpu.dot_dimension_numbers<[1], [0], [0], [1], [0, 0, 1, 1], [], []>} : vector<16x75xf32>, vector<75x75xf32>, vector<16x75xf32> -> vector<16x75xf32>
    %36 = arith.addf %31, %35 : vector<16x75xf32>
    %37 = vector.extract_strided_slice %36 {offsets = [0, 0], sizes = [4, 75], strides = [1, 1]} : vector<16x75xf32> to vector<4x75xf32>
    %c0_29 = arith.constant 0 : index
    %c0_30 = arith.constant 0 : index
    %c0_31 = arith.constant 0 : index
    %38 = vector.load %arg6[%c0_29, %c0_30, %c0_31] : memref<2x4x75xf32, #tpu.memory_space<vmem>>, vector<1x4x75xf32>
    %39 = vector.shape_cast %38 : vector<1x4x75xf32> to vector<4x75xf32>
    %40 = vector.shape_cast %37 : vector<4x75xf32> to vector<1x4x75xf32>
    tpu.vector_store %arg6[%c0_29, %c0_30, %c0_31], %40 {strides = array<i32>} : memref<2x4x75xf32, #tpu.memory_space<vmem>>, vector<1x4x75xf32>,
    %41 = vector.extract_strided_slice %36 {offsets = [8, 0], sizes = [4, 75], strides = [1, 1]} : vector<16x75xf32> to vector<4x75xf32>
    %c1_32 = arith.constant 1 : index
    %c0_33 = arith.constant 0 : index
    %c0_34 = arith.constant 0 : index
    %42 = vector.load %arg6[%c1_32, %c0_33, %c0_34] : memref<2x4x75xf32, #tpu.memory_space<vmem>>, vector<1x4x75xf32>
    %43 = vector.shape_cast %42 : vector<1x4x75xf32> to vector<4x75xf32>
    %44 = vector.shape_cast %41 : vector<4x75xf32> to vector<1x4x75xf32>
    tpu.vector_store %arg6[%c1_32, %c0_33, %c0_34], %44 {strides = array<i32>} : memref<2x4x75xf32, #tpu.memory_space<vmem>>, vector<1x4x75xf32>,
    return
  }
}

</mosaic_0001>

<llo_original>
// kernel: model_forward.1
$region0: #{model_forward.1}
  #allocation0 [shape = 'u32[]', space=smem, size = 0x4, offset = 0x4, fixed_abs, tag = 'smem constant byte address 0x4 - core index']
  #allocation1 [shape = 'u32[144,128]{1,0:T(1,128)}', space=vmem, size = 0x12000, scoped, tag = 'internal scratch']
  %s0 = inlined_call_operand.hbm [shape: f32[16,75], index: 0, kind: input, shape index: {}]
  %s1 = inlined_call_operand.hbm [shape: f32[16,75], index: 1, kind: input, shape index: {}]
  %s2 = inlined_call_operand.hbm [shape: f32[48,16], index: 2, kind: input, shape index: {}]
  %s3 = inlined_call_operand.hbm [shape: f32[48,16], index: 3, kind: input, shape index: {}]
  %s4 = inlined_call_operand.hbm [shape: f32[6,75,75], index: 4, kind: input, shape index: {}]
  %s5 = inlined_call_operand.hbm [shape: f32[16,75], index: 5, kind: input, shape index: {}]
  %s6 = inlined_call_operand.hbm [shape: f32[2,4,75], index: 6, kind: output, shape index: {}]
  %s7 = sld [smem:[#allocation0]]
  $region58: #{model_forward.1} parent=0
    _
  %s9 = ssub.s32 1, %s7
  %s10 = scalar_select 0, %s9, %s7
  $region1: #{model_forward.1} parent=0
    #allocation2 [shape = 'u8[8192]{0}', space=vmem, size = 0x2000, scoped, tag = 'input window, operand 0, single buffered']
    #allocation3 [shape = 's32[1]{0}', space=sflag, size = 0x4, scoped, tag = 'scoped memory for model_forward.1']
    #allocation4 [shape = 's32[1]{0}', space=sflag, size = 0x4, scoped, tag = 'scoped memory for model_forward.1']
    #allocation5 [shape = 'u8[8192]{0}', space=vmem, size = 0x2000, scoped, tag = 'input window, operand 1, single buffered']
    #allocation6 [shape = 's32[1]{0}', space=sflag, size = 0x4, scoped, tag = 'scoped memory for model_forward.1']
    #allocation7 [shape = 'u8[24576]{0}', space=vmem, size = 0x6000, scoped, tag = 'input window, operand 2, single buffered']
    #allocation8 [shape = 'u8[24576]{0}', space=vmem, size = 0x6000, scoped, tag = 'input window, operand 3, single buffered']
    #allocation9 [shape = 's32[1]{0}', space=sflag, size = 0x4, scoped, tag = 'scoped memory for model_forward.1']
    #allocation10 [shape = 'u8[245760]{0}', space=vmem, size = 0x3c000, scoped, tag = 'input window, operand 4, single buffered']
    #allocation11 [shape = 'u8[8192]{0}', space=vmem, size = 0x2000, scoped, tag = 'input window, operand 5, single buffered']
    #allocation12 [shape = 's32[1]{0}', space=sflag, size = 0x4, scoped, tag = 'scoped memory for model_forward.1']
    #allocation13 [shape = 'u8[4096]{0}', space=vmem, size = 0x1000, scoped, tag = 'output window, operand 0, single buffered']
    %11 = vsyncpa [#allocation3], 0
    %12 = vsyncpa [#allocation6], 0
    %13 = vsyncpa [#allocation9], 0
    %14 = vsyncpa [#allocation12], 0
    %15 = vsyncpa [#allocation4], 0
    // Predicated region
    $region2: #{model_forward.1} parent=1 // pred_check
      _
    $region3: #{model_forward.1} parent=1 // pred_check_branch
      %17 = sbr.rel (0) target = $region5
    $region4: #{model_forward.1} parent=1 // pred_region
      %s19 = ssub.s32 256, 256
      %20 = vsyncadd [#allocation3], %s19
      %s21 = sshll.u32 [#allocation2], 4
      %s22 = int_to_ptr.vmem [resolvable:$true] %s21
      %27 = dma.hbm_to_vmem [thread:$0]  %s0, 256, %s22, [#allocation3], 128, 128, 8
    $region5: #{model_forward.1} parent=1 // pred_fallthru
      _
    // Predicated region
    $region6: #{model_forward.1} parent=1 // pred_check
      _
    $region7: #{model_forward.1} parent=1 // pred_check_branch
      %29 = sbr.rel (0) target = $region9
    $region8: #{model_forward.1} parent=1 // pred_region
      %s31 = ssub.s32 256, 256
      %32 = vsyncadd [#allocation6], %s31
      %s33 = sshll.u32 [#allocation5], 4
      %s34 = int_to_ptr.vmem [resolvable:$true] %s33
      %39 = dma.hbm_to_vmem [thread:$0]  %s1, 256, %s34, [#allocation6], 128, 128, 8
    $region9: #{model_forward.1} parent=1 // pred_fallthru
      _
    // Predicated region
    $region10: #{model_forward.1} parent=1 // pred_check
      _
    $region11: #{model_forward.1} parent=1 // pred_check_branch
      %41 = sbr.rel (0) target = $region13
    $region12: #{model_forward.1} parent=1 // pred_region
      %s43 = ssub.s32 768, 768
      %44 = vsyncadd [#allocation6], %s43
      %s45 = sshll.u32 [#allocation7], 4
      %s46 = int_to_ptr.vmem [resolvable:$true] %s45
      %51 = dma.hbm_to_vmem [thread:$0]  %s2, 768, %s46, [#allocation6], 128, 128, 8
    $region13: #{model_forward.1} parent=1 // pred_fallthru
      _
    // Predicated region
    $region14: #{model_forward.1} parent=1 // pred_check
      _
    $region15: #{model_forward.1} parent=1 // pred_check_branch
      %53 = sbr.rel (0) target = $region17
    $region16: #{model_forward.1} parent=1 // pred_region
      %s55 = ssub.s32 768, 768
      %56 = vsyncadd [#allocation9], %s55
      %s57 = sshll.u32 [#allocation8], 4
      %s58 = int_to_ptr.vmem [resolvable:$true] %s57
      %63 = dma.hbm_to_vmem [thread:$0]  %s3, 768, %s58, [#allocation9], 128, 128, 8
    $region17: #{model_forward.1} parent=1 // pred_fallthru
      _
    // Predicated region
    $region18: #{model_forward.1} parent=1 // pred_check
      _
    $region19: #{model_forward.1} parent=1 // pred_check_branch
      %65 = sbr.rel (0) target = $region21
    $region20: #{model_forward.1} parent=1 // pred_region
      %s67 = ssub.s32 7680, 7680
      %68 = vsyncadd [#allocation9], %s67
      %s69 = sshll.u32 [#allocation10], 4
      %s70 = int_to_ptr.vmem [resolvable:$true] %s69
      %75 = dma.hbm_to_vmem [thread:$0]  %s4, 7680, %s70, [#allocation9], 128, 128, 8
    $region21: #{model_forward.1} parent=1 // pred_fallthru
      _
    // Predicated region
    $region22: #{model_forward.1} parent=1 // pred_check
      _
    $region23: #{model_forward.1} parent=1 // pred_check_branch
      %77 = sbr.rel (0) target = $region25
    $region24: #{model_forward.1} parent=1 // pred_region
      %s79 = ssub.s32 256, 256
      %80 = vsyncadd [#allocation12], %s79
      %s81 = sshll.u32 [#allocation11], 4
      %s82 = int_to_ptr.vmem [resolvable:$true] %s81
      %87 = dma.hbm_to_vmem [thread:$0]  %s5, 256, %s82, [#allocation12], 128, 128, 8
    $region25: #{model_forward.1} parent=1 // pred_fallthru
      _
    // Predicated region
    $region26: #{model_forward.1} parent=1 // pred_check
      _
    $region27: #{model_forward.1} parent=1 // pred_check_branch
      %89 = sbr.rel (0) target = $region29
    $region28: #{model_forward.1} parent=1 // pred_region
      %90 = dma.done [#allocation3], 256
    $region29: #{model_forward.1} parent=1 // pred_fallthru
      _
    // Predicated region
    $region30: #{model_forward.1} parent=1 // pred_check
      _
    $region31: #{model_forward.1} parent=1 // pred_check_branch
      %92 = sbr.rel (0) target = $region33
    $region32: #{model_forward.1} parent=1 // pred_region
      %93 = dma.done [#allocation6], 256
    $region33: #{model_forward.1} parent=1 // pred_fallthru
      _
    // Predicated region
    $region34: #{model_forward.1} parent=1 // pred_check
      _
    $region35: #{model_forward.1} parent=1 // pred_check_branch
      %95 = sbr.rel (0) target = $region37
    $region36: #{model_forward.1} parent=1 // pred_region
      %96 = dma.done [#allocation6], 768
    $region37: #{model_forward.1} parent=1 // pred_fallthru
      _
    // Predicated region
    $region38: #{model_forward.1} parent=1 // pred_check
      _
    $region39: #{model_forward.1} parent=1 // pred_check_branch
      %98 = sbr.rel (0) target = $region41
    $region40: #{model_forward.1} parent=1 // pred_region
      %99 = dma.done [#allocation9], 768
    $region41: #{model_forward.1} parent=1 // pred_fallthru
      _
    // Predicated region
    $region42: #{model_forward.1} parent=1 // pred_check
      _
    $region43: #{model_forward.1} parent=1 // pred_check_branch
      %101 = sbr.rel (0) target = $region45
    $region44: #{model_forward.1} parent=1 // pred_region
      %102 = dma.done [#allocation9], 7680
    $region45: #{model_forward.1} parent=1 // pred_fallthru
      _
    // Predicated region
    $region46: #{model_forward.1} parent=1 // pred_check
      _
    $region47: #{model_forward.1} parent=1 // pred_check_branch
      %104 = sbr.rel (0) target = $region49
    $region48: #{model_forward.1} parent=1 // pred_region
      %105 = dma.done [#allocation12], 256
    $region49: #{model_forward.1} parent=1 // pred_fallthru
      _
    %v106 = vld [vmem:[#allocation2] sm:$0xff]
    %v107 = vld [vmem:[#allocation2 + $0x8] sm:$0xff]
    %v108 = vld [vmem:[#allocation5] sm:$0xff]
    %v109 = vld [vmem:[#allocation5 + $0x8] sm:$0xff]
    %v110 = vld [vmem:[#allocation7] sm:$0xff]
    %v111 = vld [vmem:[#allocation7 + $0x8] sm:$0xff]
    %v112 = vld [vmem:[#allocation7 + $0x10] sm:$0xff]
    %v113 = vld [vmem:[#allocation7 + $0x18] sm:$0xff]
    %v114 = vld [vmem:[#allocation7 + $0x20] sm:$0xff]
    %v115 = vld [vmem:[#allocation7 + $0x28] sm:$0xff]
    %vm116 = vcmask 130048
    %v118 = vsel %vm116, %v110, 0
    %v121 = vsel %vm116, %v111, 0
    %v124 = vsel %vm116, %v112, 0
    %v127 = vsel %vm116, %v113, 0
    %v130 = vsel %vm116, %v114, 0
    %v133 = vsel %vm116, %v115, 0
    %135 = vmatprep.subr.mxu0 0.0
    %136 = vmatpush1.msra.mxu0 0.0
    %137 = vmatprep.subr.mxu0 0.0
    %138 = vmatpush1.msra.mxu0 0.0
    %139 = vmatprep.subr.mxu0 0.0
    %140 = vmatpush1.msra.mxu0 0.0
    %141 = vmatprep.subr.mxu0 0.0
    %142 = vmatpush1.msra.mxu0 0.0
    %143 = vmatprep.subr.mxu0 0.0
    %144 = vmatpush1.msra.mxu0 0.0
    %145 = vmatprep.subr.mxu0 0.0
    %146 = vmatpush1.msra.mxu0 0.0
    %147 = vmatprep.subr.mxu0 0.0
    %148 = vmatpush1.msra.mxu0 0.0
    %149 = vmatprep.subr.mxu0 0.0
    %150 = vmatpush1.msra.mxu0 0.0
    %151 = vmatprep.subr.mxu0 0.0
    %152 = vmatpush1.msra.mxu0 0.0
    %153 = vmatprep.subr.mxu0 0.0
    %154 = vmatpush1.msra.mxu0 0.0
    %155 = vmatprep.subr.mxu0 0.0
    %156 = vmatpush1.msra.mxu0 0.0
    %157 = vmatprep.subr.mxu0 0.0
    %158 = vmatpush1.msra.mxu0 0.0
    %159 = vmatprep.subr.mxu0 0.0
    %160 = vmatpush1.msra.mxu0 0.0
    %161 = vmatprep.subr.mxu0 0.0
    %162 = vmatpush1.msra.mxu0 0.0
    %163 = vmatprep.subr.mxu0 0.0
    %164 = vmatpush1.msra.mxu0 %v107
    %165 = vmatprep.subr.mxu0 0.0
    %166 = vmatpush1.msra.mxu0 %v106
    %167 = vmatprep.subr.mxu0 0.0
    %168 = vmatpush2.msra.mxu0 0.0
    %169 = vmatprep.subr.mxu0 0.0
    %170 = vmatpush2.msra.mxu0 0.0
    %171 = vmatprep.subr.mxu0 0.0
    %172 = vmatpush2.msra.mxu0 0.0
    %173 = vmatprep.subr.mxu0 0.0
    %174 = vmatpush2.msra.mxu0 0.0
    %175 = vmatprep.subr.mxu0 0.0
    %176 = vmatpush2.msra.mxu0 0.0
    %177 = vmatprep.subr.mxu0 0.0
    %178 = vmatpush2.msra.mxu0 0.0
    %179 = vmatprep.subr.mxu0 0.0
    %180 = vmatpush2.msra.mxu0 0.0
    %181 = vmatprep.subr.mxu0 0.0
    %182 = vmatpush2.msra.mxu0 0.0
    %183 = vmatprep.subr.mxu0 0.0
    %184 = vmatpush2.msra.mxu0 0.0
    %185 = vmatprep.subr.mxu0 0.0
    %186 = vmatpush2.msra.mxu0 0.0
    %187 = vmatprep.subr.mxu0 0.0
    %188 = vmatpush2.msra.mxu0 0.0
    %189 = vmatprep.subr.mxu0 0.0
    %190 = vmatpush2.msra.mxu0 0.0
    %191 = vmatprep.subr.mxu0 0.0
    %192 = vmatpush2.msra.mxu0 0.0
    %193 = vmatprep.subr.mxu0 0.0
    %194 = vmatpush2.msra.mxu0 0.0
    %195 = vmatprep.subr.mxu0 0.0
    %196 = vmatpush2.msra.mxu0 0.0
    %197 = vmatprep.subr.mxu0 0.0
    %198 = vmatpush2.msra.mxu0 0.0
    %199 = vmatprep.mubr.f32.mxu0 0.0
    %200 = vmatmul.mubr.f32.gmra.mxu0 %v118
    %v201 = vpop.f32.mrf.mxu0
    %v202 = vadd.f32 0.0, %v201
    %v203 = vpop.f32.mrf.mxu0
    %204 = vmatprep.mubr.f32.mxu0 0.0
    %205 = vmatmul.mubr.f32.gmra.mxu0 %v121
    %v206 = vpop.f32.mrf.mxu0
    %v207 = vadd.f32 0.0, %v206
    %v208 = vpop.f32.mrf.mxu0
    %209 = vmatprep.mubr.f32.mxu0 0.0
    %210 = vmatmul.mubr.f32.gmra.mxu0 %v124
    %v211 = vpop.f32.mrf.mxu0
    %v212 = vadd.f32 0.0, %v211
    %v213 = vpop.f32.mrf.mxu0
    %214 = vmatprep.mubr.f32.mxu0 0.0
    %215 = vmatmul.mubr.f32.gmra.mxu0 %v127
    %v216 = vpop.f32.mrf.mxu0
    %v217 = vadd.f32 0.0, %v216
    %v218 = vpop.f32.mrf.mxu0
    %219 = vmatprep.mubr.f32.mxu0 0.0
    %220 = vmatmul.mubr.f32.gmra.mxu0 %v130
    %v221 = vpop.f32.mrf.mxu0
    %v222 = vadd.f32 0.0, %v221
    %v223 = vpop.f32.mrf.mxu0
    %224 = vmatprep.mubr.f32.mxu0 0.0
    %225 = vmatmul.mubr.f32.gmra.mxu0 %v133
    %v226 = vpop.f32.mrf.mxu0
    %v227 = vadd.f32 0.0, %v226
    %v228 = vpop.f32.mrf.mxu0
    %229 = vdwg.mxu0
    %v230 = vld [vmem:[#allocation8] sm:$0xff]
    %v231 = vld [vmem:[#allocation8 + $0x8] sm:$0xff]
    %v232 = vld [vmem:[#allocation8 + $0x10] sm:$0xff]
    %v233 = vld [vmem:[#allocation8 + $0x18] sm:$0xff]
    %v234 = vld [vmem:[#allocation8 + $0x20] sm:$0xff]
    %v235 = vld [vmem:[#allocation8 + $0x28] sm:$0xff]
    %v237 = vsel %vm116, %v230, 0
    %v240 = vsel %vm116, %v231, 0
    %v243 = vsel %vm116, %v232, 0
    %v246 = vsel %vm116, %v233, 0
    %v249 = vsel %vm116, %v234, 0
    %v252 = vsel %vm116, %v235, 0
    %254 = vmatprep.subr.mxu0 0.0
    %255 = vmatpush1.msra.mxu0 0.0
    %256 = vmatprep.subr.mxu0 0.0
    %257 = vmatpush1.msra.mxu0 0.0
    %258 = vmatprep.subr.mxu0 0.0
    %259 = vmatpush1.msra.mxu0 0.0
    %260 = vmatprep.subr.mxu0 0.0
    %261 = vmatpush1.msra.mxu0 0.0
    %262 = vmatprep.subr.mxu0 0.0
    %263 = vmatpush1.msra.mxu0 0.0
    %264 = vmatprep.subr.mxu0 0.0
    %265 = vmatpush1.msra.mxu0 0.0
    %266 = vmatprep.subr.mxu0 0.0
    %267 = vmatpush1.msra.mxu0 0.0
    %268 = vmatprep.subr.mxu0 0.0
    %269 = vmatpush1.msra.mxu0 0.0
    %270 = vmatprep.subr.mxu0 0.0
    %271 = vmatpush1.msra.mxu0 0.0
    %272 = vmatprep.subr.mxu0 0.0
    %273 = vmatpush1.msra.mxu0 0.0
    %274 = vmatprep.subr.mxu0 0.0
    %275 = vmatpush1.msra.mxu0 0.0
    %276 = vmatprep.subr.mxu0 0.0
    %277 = vmatpush1.msra.mxu0 0.0
    %278 = vmatprep.subr.mxu0 0.0
    %279 = vmatpush1.msra.mxu0 0.0
    %280 = vmatprep.subr.mxu0 0.0
    %281 = vmatpush1.msra.mxu0 0.0
    %282 = vmatprep.subr.mxu0 0.0
    %283 = vmatpush1.msra.mxu0 %v109
    %284 = vmatprep.subr.mxu0 0.0
    %285 = vmatpush1.msra.mxu0 %v108
    %286 = vmatprep.subr.mxu0 0.0
    %287 = vmatpush2.msra.mxu0 0.0
    %288 = vmatprep.subr.mxu0 0.0
    %289 = vmatpush2.msra.mxu0 0.0
    %290 = vmatprep.subr.mxu0 0.0
    %291 = vmatpush2.msra.mxu0 0.0
    %292 = vmatprep.subr.mxu0 0.0
    %293 = vmatpush2.msra.mxu0 0.0
    %294 = vmatprep.subr.mxu0 0.0
    %295 = vmatpush2.msra.mxu0 0.0
    %296 = vmatprep.subr.mxu0 0.0
    %297 = vmatpush2.msra.mxu0 0.0
    %298 = vmatprep.subr.mxu0 0.0
    %299 = vmatpush2.msra.mxu0 0.0
    %300 = vmatprep.subr.mxu0 0.0
    %301 = vmatpush2.msra.mxu0 0.0
    %302 = vmatprep.subr.mxu0 0.0
    %303 = vmatpush2.msra.mxu0 0.0
    %304 = vmatprep.subr.mxu0 0.0
    %305 = vmatpush2.msra.mxu0 0.0
    %306 = vmatprep.subr.mxu0 0.0
    %307 = vmatpush2.msra.mxu0 0.0
    %308 = vmatprep.subr.mxu0 0.0
    %309 = vmatpush2.msra.mxu0 0.0
    %310 = vmatprep.subr.mxu0 0.0
    %311 = vmatpush2.msra.mxu0 0.0
    %312 = vmatprep.subr.mxu0 0.0
    %313 = vmatpush2.msra.mxu0 0.0
    %314 = vmatprep.subr.mxu0 0.0
    %315 = vmatpush2.msra.mxu0 0.0
    %316 = vmatprep.subr.mxu0 0.0
    %317 = vmatpush2.msra.mxu0 0.0
    %318 = vmatprep.mubr.f32.mxu0 0.0
    %319 = vmatmul.mubr.f32.gmra.mxu0 %v237
    %v320 = vpop.f32.mrf.mxu0
    %v321 = vadd.f32 0.0, %v320
    %v322 = vpop.f32.mrf.mxu0
    %323 = vmatprep.mubr.f32.mxu0 0.0
    %324 = vmatmul.mubr.f32.gmra.mxu0 %v240
    %v325 = vpop.f32.mrf.mxu0
    %v326 = vadd.f32 0.0, %v325
    %v327 = vpop.f32.mrf.mxu0
    %328 = vmatprep.mubr.f32.mxu0 0.0
    %329 = vmatmul.mubr.f32.gmra.mxu0 %v243
    %v330 = vpop.f32.mrf.mxu0
    %v331 = vadd.f32 0.0, %v330
    %v332 = vpop.f32.mrf.mxu0
    %333 = vmatprep.mubr.f32.mxu0 0.0
    %334 = vmatmul.mubr.f32.gmra.mxu0 %v246
    %v335 = vpop.f32.mrf.mxu0
    %v336 = vadd.f32 0.0, %v335
    %v337 = vpop.f32.mrf.mxu0
    %338 = vmatprep.mubr.f32.mxu0 0.0
    %339 = vmatmul.mubr.f32.gmra.mxu0 %v249
    %v340 = vpop.f32.mrf.mxu0
    %v341 = vadd.f32 0.0, %v340
    %v342 = vpop.f32.mrf.mxu0
    %343 = vmatprep.mubr.f32.mxu0 0.0
    %344 = vmatmul.mubr.f32.gmra.mxu0 %v252
    %v345 = vpop.f32.mrf.mxu0
    %v346 = vadd.f32 0.0, %v345
    %v347 = vpop.f32.mrf.mxu0
    %348 = vdwg.mxu0
    %v349 = vld [vmem:[#allocation11] sm:$0xff]
    %v350 = vld [vmem:[#allocation11 + $0x8] sm:$0xff]
    %v351 = vld [vmem:[#allocation10] sm:$0xff]
    %v352 = vld [vmem:[#allocation10 + $0x8] sm:$0xff]
    %v353 = vld [vmem:[#allocation10 + $0x10] sm:$0xff]
    %v354 = vld [vmem:[#allocation10 + $0x18] sm:$0xff]
    %v355 = vld [vmem:[#allocation10 + $0x20] sm:$0xff]
    %v356 = vld [vmem:[#allocation10 + $0x28] sm:$0xff]
    %v357 = vld [vmem:[#allocation10 + $0x30] sm:$0xff]
    %v358 = vld [vmem:[#allocation10 + $0x38] sm:$0xff]
    %v359 = vld [vmem:[#allocation10 + $0x40] sm:$0xff]
    %v360 = vld [vmem:[#allocation10 + $0x48] sm:$0x7]
    %vm361 = vcmask 613376
    %v363 = vsel %vm361, %v202, 0
    %v366 = vsel %vm361, %v207, 0
    %vm368 = vcmask 1042432
    %v370 = vsel %vm368, %v360, 0
    %372 = vmatprep.subr.mxu0 0.0
    %373 = vmatpush1.msra.mxu0 0.0
    %374 = vmatprep.subr.mxu0 0.0
    %375 = vmatpush1.msra.mxu0 0.0
    %376 = vmatprep.subr.mxu0 0.0
    %377 = vmatpush1.msra.mxu0 0.0
    %378 = vmatprep.subr.mxu0 0.0
    %379 = vmatpush1.msra.mxu0 0.0
    %380 = vmatprep.subr.mxu0 0.0
    %381 = vmatpush1.msra.mxu0 0.0
    %382 = vmatprep.subr.mxu0 0.0
    %383 = vmatpush1.msra.mxu0 0.0
    %384 = vmatprep.subr.mxu0 0.0
    %385 = vmatpush1.msra.mxu0 %v370
    %386 = vmatprep.subr.mxu0 0.0
    %387 = vmatpush1.msra.mxu0 %v359
    %388 = vmatprep.subr.mxu0 0.0
    %389 = vmatpush1.msra.mxu0 %v358
    %390 = vmatprep.subr.mxu0 0.0
    %391 = vmatpush1.msra.mxu0 %v357
    %392 = vmatprep.subr.mxu0 0.0
    %393 = vmatpush1.msra.mxu0 %v356
    %394 = vmatprep.subr.mxu0 0.0
    %395 = vmatpush1.msra.mxu0 %v355
    %396 = vmatprep.subr.mxu0 0.0
    %397 = vmatpush1.msra.mxu0 %v354
    %398 = vmatprep.subr.mxu0 0.0
    %399 = vmatpush1.msra.mxu0 %v353
    %400 = vmatprep.subr.mxu0 0.0
    %401 = vmatpush1.msra.mxu0 %v352
    %402 = vmatprep.subr.mxu0 0.0
    %403 = vmatpush1.msra.mxu0 %v351
    %404 = vmatprep.subr.mxu0 0.0
    %405 = vmatpush2.msra.mxu0 0.0
    %406 = vmatprep.subr.mxu0 0.0
    %407 = vmatpush2.msra.mxu0 0.0
    %408 = vmatprep.subr.mxu0 0.0
    %409 = vmatpush2.msra.mxu0 0.0
    %410 = vmatprep.subr.mxu0 0.0
    %411 = vmatpush2.msra.mxu0 0.0
    %412 = vmatprep.subr.mxu0 0.0
    %413 = vmatpush2.msra.mxu0 0.0
    %414 = vmatprep.subr.mxu0 0.0
    %415 = vmatpush2.msra.mxu0 0.0
    %416 = vmatprep.subr.mxu0 0.0
    %417 = vmatpush2.msra.mxu0 0.0
    %418 = vmatprep.subr.mxu0 0.0
    %419 = vmatpush2.msra.mxu0 0.0
    %420 = vmatprep.subr.mxu0 0.0
    %421 = vmatpush2.msra.mxu0 0.0
    %422 = vmatprep.subr.mxu0 0.0
    %423 = vmatpush2.msra.mxu0 0.0
    %424 = vmatprep.subr.mxu0 0.0
    %425 = vmatpush2.msra.mxu0 0.0
    %426 = vmatprep.subr.mxu0 0.0
    %427 = vmatpush2.msra.mxu0 0.0
    %428 = vmatprep.subr.mxu0 0.0
    %429 = vmatpush2.msra.mxu0 0.0
    %430 = vmatprep.subr.mxu0 0.0
    %431 = vmatpush2.msra.mxu0 0.0
    %432 = vmatprep.subr.mxu0 0.0
    %433 = vmatpush2.msra.mxu0 0.0
    %434 = vmatprep.subr.mxu0 0.0
    %435 = vmatpush2.msra.mxu0 0.0
    %436 = vmatprep.mubr.f32.mxu0 0.0
    %437 = vmatmul.mubr.f32.gmra.mxu0 %v363
    %v438 = vpop.f32.mrf.mxu0
    %v439 = vadd.f32 0.0, %v438
    %v440 = vpop.f32.mrf.mxu0
    %441 = vmatprep.mubr.f32.mxu0 0.0
    %442 = vmatmul.mubr.f32.gmra.mxu0 %v366
    %v443 = vpop.f32.mrf.mxu0
    %v444 = vadd.f32 0.0, %v443
    %v445 = vpop.f32.mrf.mxu0
    %446 = vdwg.mxu0
    %v447 = vadd.f32 %v349, %v439
    %v448 = vadd.f32 %v350, %v444
    %s449 = scalar_lea.vmem [#allocation10], 240
    %v450 = vld [vmem:[%s449] sm:$0xff]
    %v451 = vld [vmem:[%s449 + $0x8] sm:$0xff]
    %v452 = vld [vmem:[%s449 + $0x10] sm:$0xff]
    %v453 = vld [vmem:[%s449 + $0x18] sm:$0xff]
    %v454 = vld [vmem:[%s449 + $0x20] sm:$0xff]
    %v455 = vld [vmem:[%s449 + $0x28] sm:$0xff]
    %v456 = vld [vmem:[%s449 + $0x30] sm:$0xff]
    %v457 = vld [vmem:[%s449 + $0x38] sm:$0xff]
    %v458 = vld [vmem:[%s449 + $0x40] sm:$0xff]
    %v459 = vld [vmem:[%s449 + $0x48] sm:$0x7]
    %v461 = vsel %vm361, %v321, 0
    %v464 = vsel %vm361, %v326, 0
    %v467 = vsel %vm368, %v459, 0
    %469 = vmatprep.subr.mxu0 0.0
    %470 = vmatpush1.msra.mxu0 0.0
    %471 = vmatprep.subr.mxu0 0.0
    %472 = vmatpush1.msra.mxu0 0.0
    %473 = vmatprep.subr.mxu0 0.0
    %474 = vmatpush1.msra.mxu0 0.0
    %475 = vmatprep.subr.mxu0 0.0
    %476 = vmatpush1.msra.mxu0 0.0
    %477 = vmatprep.subr.mxu0 0.0
    %478 = vmatpush1.msra.mxu0 0.0
    %479 = vmatprep.subr.mxu0 0.0
    %480 = vmatpush1.msra.mxu0 0.0
    %481 = vmatprep.subr.mxu0 0.0
    %482 = vmatpush1.msra.mxu0 %v467
    %483 = vmatprep.subr.mxu0 0.0
    %484 = vmatpush1.msra.mxu0 %v458
    %485 = vmatprep.subr.mxu0 0.0
    %486 = vmatpush1.msra.mxu0 %v457
    %487 = vmatprep.subr.mxu0 0.0
    %488 = vmatpush1.msra.mxu0 %v456
    %489 = vmatprep.subr.mxu0 0.0
    %490 = vmatpush1.msra.mxu0 %v455
    %491 = vmatprep.subr.mxu0 0.0
    %492 = vmatpush1.msra.mxu0 %v454
    %493 = vmatprep.subr.mxu0 0.0
    %494 = vmatpush1.msra.mxu0 %v453
    %495 = vmatprep.subr.mxu0 0.0
    %496 = vmatpush1.msra.mxu0 %v452
    %497 = vmatprep.subr.mxu0 0.0
    %498 = vmatpush1.msra.mxu0 %v451
    %499 = vmatprep.subr.mxu0 0.0
    %500 = vmatpush1.msra.mxu0 %v450
    %501 = vmatprep.subr.mxu0 0.0
    %502 = vmatpush2.msra.mxu0 0.0
    %503 = vmatprep.subr.mxu0 0.0
    %504 = vmatpush2.msra.mxu0 0.0
    %505 = vmatprep.subr.mxu0 0.0
    %506 = vmatpush2.msra.mxu0 0.0
    %507 = vmatprep.subr.mxu0 0.0
    %508 = vmatpush2.msra.mxu0 0.0
    %509 = vmatprep.subr.mxu0 0.0
    %510 = vmatpush2.msra.mxu0 0.0
    %511 = vmatprep.subr.mxu0 0.0
    %512 = vmatpush2.msra.mxu0 0.0
    %513 = vmatprep.subr.mxu0 0.0
    %514 = vmatpush2.msra.mxu0 0.0
    %515 = vmatprep.subr.mxu0 0.0
    %516 = vmatpush2.msra.mxu0 0.0
    %517 = vmatprep.subr.mxu0 0.0
    %518 = vmatpush2.msra.mxu0 0.0
    %519 = vmatprep.subr.mxu0 0.0
    %520 = vmatpush2.msra.mxu0 0.0
    %521 = vmatprep.subr.mxu0 0.0
    %522 = vmatpush2.msra.mxu0 0.0
    %523 = vmatprep.subr.mxu0 0.0
    %524 = vmatpush2.msra.mxu0 0.0
    %525 = vmatprep.subr.mxu0 0.0
    %526 = vmatpush2.msra.mxu0 0.0
    %527 = vmatprep.subr.mxu0 0.0
    %528 = vmatpush2.msra.mxu0 0.0
    %529 = vmatprep.subr.mxu0 0.0
    %530 = vmatpush2.msra.mxu0 0.0
    %531 = vmatprep.subr.mxu0 0.0
    %532 = vmatpush2.msra.mxu0 0.0
    %533 = vmatprep.mubr.f32.mxu0 0.0
    %534 = vmatmul.mubr.f32.gmra.mxu0 %v461
    %v535 = vpop.f32.mrf.mxu0
    %v536 = vadd.f32 0.0, %v535
    %v537 = vpop.f32.mrf.mxu0
    %538 = vmatprep.mubr.f32.mxu0 0.0
    %539 = vmatmul.mubr.f32.gmra.mxu0 %v464
    %v540 = vpop.f32.mrf.mxu0
    %v541 = vadd.f32 0.0, %v540
    %v542 = vpop.f32.mrf.mxu0
    %543 = vdwg.mxu0
    %v544 = vadd.f32 %v447, %v536
    %v545 = vadd.f32 %v448, %v541
    %s546 = scalar_lea.vmem [#allocation10], 80
    %v547 = vld [vmem:[%s546] sm:$0xff]
    %v548 = vld [vmem:[%s546 + $0x8] sm:$0xff]
    %v549 = vld [vmem:[%s546 + $0x10] sm:$0xff]
    %v550 = vld [vmem:[%s546 + $0x18] sm:$0xff]
    %v551 = vld [vmem:[%s546 + $0x20] sm:$0xff]
    %v552 = vld [vmem:[%s546 + $0x28] sm:$0xff]
    %v553 = vld [vmem:[%s546 + $0x30] sm:$0xff]
    %v554 = vld [vmem:[%s546 + $0x38] sm:$0xff]
    %v555 = vld [vmem:[%s546 + $0x40] sm:$0xff]
    %v556 = vld [vmem:[%s546 + $0x48] sm:$0x7]
    %v558 = vsel %vm361, %v212, 0
    %v561 = vsel %vm361, %v217, 0
    %v564 = vsel %vm368, %v556, 0
    %566 = vmatprep.subr.mxu0 0.0
    %567 = vmatpush1.msra.mxu0 0.0
    %568 = vmatprep.subr.mxu0 0.0
    %569 = vmatpush1.msra.mxu0 0.0
    %570 = vmatprep.subr.mxu0 0.0
    %571 = vmatpush1.msra.mxu0 0.0
    %572 = vmatprep.subr.mxu0 0.0
    %573 = vmatpush1.msra.mxu0 0.0
    %574 = vmatprep.subr.mxu0 0.0
    %575 = vmatpush1.msra.mxu0 0.0
    %576 = vmatprep.subr.mxu0 0.0
    %577 = vmatpush1.msra.mxu0 0.0
    %578 = vmatprep.subr.mxu0 0.0
    %579 = vmatpush1.msra.mxu0 %v564
    %580 = vmatprep.subr.mxu0 0.0
    %581 = vmatpush1.msra.mxu0 %v555
    %582 = vmatprep.subr.mxu0 0.0
    %583 = vmatpush1.msra.mxu0 %v554
    %584 = vmatprep.subr.mxu0 0.0
    %585 = vmatpush1.msra.mxu0 %v553
    %586 = vmatprep.subr.mxu0 0.0
    %587 = vmatpush1.msra.mxu0 %v552
    %588 = vmatprep.subr.mxu0 0.0
    %589 = vmatpush1.msra.mxu0 %v551
    %590 = vmatprep.subr.mxu0 0.0
    %591 = vmatpush1.msra.mxu0 %v550
    %592 = vmatprep.subr.mxu0 0.0
    %593 = vmatpush1.msra.mxu0 %v549
    %594 = vmatprep.subr.mxu0 0.0
    %595 = vmatpush1.msra.mxu0 %v548
    %596 = vmatprep.subr.mxu0 0.0
    %597 = vmatpush1.msra.mxu0 %v547
    %598 = vmatprep.subr.mxu0 0.0
    %599 = vmatpush2.msra.mxu0 0.0
    %600 = vmatprep.subr.mxu0 0.0
    %601 = vmatpush2.msra.mxu0 0.0
    %602 = vmatprep.subr.mxu0 0.0
    %603 = vmatpush2.msra.mxu0 0.0
    %604 = vmatprep.subr.mxu0 0.0
    %605 = vmatpush2.msra.mxu0 0.0
    %606 = vmatprep.subr.mxu0 0.0
    %607 = vmatpush2.msra.mxu0 0.0
    %608 = vmatprep.subr.mxu0 0.0
    %609 = vmatpush2.msra.mxu0 0.0
    %610 = vmatprep.subr.mxu0 0.0
    %611 = vmatpush2.msra.mxu0 0.0
    %612 = vmatprep.subr.mxu0 0.0
    %613 = vmatpush2.msra.mxu0 0.0
    %614 = vmatprep.subr.mxu0 0.0
    %615 = vmatpush2.msra.mxu0 0.0
    %616 = vmatprep.subr.mxu0 0.0
    %617 = vmatpush2.msra.mxu0 0.0
    %618 = vmatprep.subr.mxu0 0.0
    %619 = vmatpush2.msra.mxu0 0.0
    %620 = vmatprep.subr.mxu0 0.0
    %621 = vmatpush2.msra.mxu0 0.0
    %622 = vmatprep.subr.mxu0 0.0
    %623 = vmatpush2.msra.mxu0 0.0
    %624 = vmatprep.subr.mxu0 0.0
    %625 = vmatpush2.msra.mxu0 0.0
    %626 = vmatprep.subr.mxu0 0.0
    %627 = vmatpush2.msra.mxu0 0.0
    %628 = vmatprep.subr.mxu0 0.0
    %629 = vmatpush2.msra.mxu0 0.0
    %630 = vmatprep.mubr.f32.mxu0 0.0
    %631 = vmatmul.mubr.f32.gmra.mxu0 %v558
    %v632 = vpop.f32.mrf.mxu0
    %v633 = vadd.f32 0.0, %v632
    %v634 = vpop.f32.mrf.mxu0
    %635 = vmatprep.mubr.f32.mxu0 0.0
    %636 = vmatmul.mubr.f32.gmra.mxu0 %v561
    %v637 = vpop.f32.mrf.mxu0
    %v638 = vadd.f32 0.0, %v637
    %v639 = vpop.f32.mrf.mxu0
    %640 = vdwg.mxu0
    %v641 = vadd.f32 %v544, %v633
    %v642 = vadd.f32 %v545, %v638
    %s643 = scalar_lea.vmem [#allocation10], 320
    %v644 = vld [vmem:[%s643] sm:$0xff]
    %v645 = vld [vmem:[%s643 + $0x8] sm:$0xff]
    %v646 = vld [vmem:[%s643 + $0x10] sm:$0xff]
    %v647 = vld [vmem:[%s643 + $0x18] sm:$0xff]
    %v648 = vld [vmem:[%s643 + $0x20] sm:$0xff]
    %v649 = vld [vmem:[%s643 + $0x28] sm:$0xff]
    %v650 = vld [vmem:[%s643 + $0x30] sm:$0xff]
    %v651 = vld [vmem:[%s643 + $0x38] sm:$0xff]
    %v652 = vld [vmem:[%s643 + $0x40] sm:$0xff]
    %v653 = vld [vmem:[%s643 + $0x48] sm:$0x7]
    %v655 = vsel %vm361, %v331, 0
    %v658 = vsel %vm361, %v336, 0
    %v661 = vsel %vm368, %v653, 0
    %663 = vmatprep.subr.mxu0 0.0
    %664 = vmatpush1.msra.mxu0 0.0
    %665 = vmatprep.subr.mxu0 0.0
    %666 = vmatpush1.msra.mxu0 0.0
    %667 = vmatprep.subr.mxu0 0.0
    %668 = vmatpush1.msra.mxu0 0.0
    %669 = vmatprep.subr.mxu0 0.0
    %670 = vmatpush1.msra.mxu0 0.0
    %671 = vmatprep.subr.mxu0 0.0
    %672 = vmatpush1.msra.mxu0 0.0
    %673 = vmatprep.subr.mxu0 0.0
    %674 = vmatpush1.msra.mxu0 0.0
    %675 = vmatprep.subr.mxu0 0.0
    %676 = vmatpush1.msra.mxu0 %v661
    %677 = vmatprep.subr.mxu0 0.0
    %678 = vmatpush1.msra.mxu0 %v652
    %679 = vmatprep.subr.mxu0 0.0
    %680 = vmatpush1.msra.mxu0 %v651
    %681 = vmatprep.subr.mxu0 0.0
    %682 = vmatpush1.msra.mxu0 %v650
    %683 = vmatprep.subr.mxu0 0.0
    %684 = vmatpush1.msra.mxu0 %v649
    %685 = vmatprep.subr.mxu0 0.0
    %686 = vmatpush1.msra.mxu0 %v648
    %687 = vmatprep.subr.mxu0 0.0
    %688 = vmatpush1.msra.mxu0 %v647
    %689 = vmatprep.subr.mxu0 0.0
    %690 = vmatpush1.msra.mxu0 %v646
    %691 = vmatprep.subr.mxu0 0.0
    %692 = vmatpush1.msra.mxu0 %v645
    %693 = vmatprep.subr.mxu0 0.0
    %694 = vmatpush1.msra.mxu0 %v644
    %695 = vmatprep.subr.mxu0 0.0
    %696 = vmatpush2.msra.mxu0 0.0
    %697 = vmatprep.subr.mxu0 0.0
    %698 = vmatpush2.msra.mxu0 0.0
    %699 = vmatprep.subr.mxu0 0.0
    %700 = vmatpush2.msra.mxu0 0.0
    %701 = vmatprep.subr.mxu0 0.0
    %702 = vmatpush2.msra.mxu0 0.0
    %703 = vmatprep.subr.mxu0 0.0
    %704 = vmatpush2.msra.mxu0 0.0
    %705 = vmatprep.subr.mxu0 0.0
    %706 = vmatpush2.msra.mxu0 0.0
    %707 = vmatprep.subr.mxu0 0.0
    %708 = vmatpush2.msra.mxu0 0.0
    %709 = vmatprep.subr.mxu0 0.0
    %710 = vmatpush2.msra.mxu0 0.0
    %711 = vmatprep.subr.mxu0 0.0
    %712 = vmatpush2.msra.mxu0 0.0
    %713 = vmatprep.subr.mxu0 0.0
    %714 = vmatpush2.msra.mxu0 0.0
    %715 = vmatprep.subr.mxu0 0.0
    %716 = vmatpush2.msra.mxu0 0.0
    %717 = vmatprep.subr.mxu0 0.0
    %718 = vmatpush2.msra.mxu0 0.0
    %719 = vmatprep.subr.mxu0 0.0
    %720 = vmatpush2.msra.mxu0 0.0
    %721 = vmatprep.subr.mxu0 0.0
    %722 = vmatpush2.msra.mxu0 0.0
    %723 = vmatprep.subr.mxu0 0.0
    %724 = vmatpush2.msra.mxu0 0.0
    %725 = vmatprep.subr.mxu0 0.0
    %726 = vmatpush2.msra.mxu0 0.0
    %727 = vmatprep.mubr.f32.mxu0 0.0
    %728 = vmatmul.mubr.f32.gmra.mxu0 %v655
    %v729 = vpop.f32.mrf.mxu0
    %v730 = vadd.f32 0.0, %v729
    %v731 = vpop.f32.mrf.mxu0
    %732 = vmatprep.mubr.f32.mxu0 0.0
    %733 = vmatmul.mubr.f32.gmra.mxu0 %v658
    %v734 = vpop.f32.mrf.mxu0
    %v735 = vadd.f32 0.0, %v734
    %v736 = vpop.f32.mrf.mxu0
    %737 = vdwg.mxu0
    %v738 = vadd.f32 %v641, %v730
    %v739 = vadd.f32 %v642, %v735
    %s740 = scalar_lea.vmem [#allocation10], 160
    %v741 = vld [vmem:[%s740] sm:$0xff]
    %v742 = vld [vmem:[%s740 + $0x8] sm:$0xff]
    %v743 = vld [vmem:[%s740 + $0x10] sm:$0xff]
    %v744 = vld [vmem:[%s740 + $0x18] sm:$0xff]
    %v745 = vld [vmem:[%s740 + $0x20] sm:$0xff]
    %v746 = vld [vmem:[%s740 + $0x28] sm:$0xff]
    %v747 = vld [vmem:[%s740 + $0x30] sm:$0xff]
    %v748 = vld [vmem:[%s740 + $0x38] sm:$0xff]
    %v749 = vld [vmem:[%s740 + $0x40] sm:$0xff]
    %v750 = vld [vmem:[%s740 + $0x48] sm:$0x7]
    %v752 = vsel %vm361, %v222, 0
    %v755 = vsel %vm361, %v227, 0
    %v758 = vsel %vm368, %v750, 0
    %760 = vmatprep.subr.mxu0 0.0
    %761 = vmatpush1.msra.mxu0 0.0
    %762 = vmatprep.subr.mxu0 0.0
    %763 = vmatpush1.msra.mxu0 0.0
    %764 = vmatprep.subr.mxu0 0.0
    %765 = vmatpush1.msra.mxu0 0.0
    %766 = vmatprep.subr.mxu0 0.0
    %767 = vmatpush1.msra.mxu0 0.0
    %768 = vmatprep.subr.mxu0 0.0
    %769 = vmatpush1.msra.mxu0 0.0
    %770 = vmatprep.subr.mxu0 0.0
    %771 = vmatpush1.msra.mxu0 0.0
    %772 = vmatprep.subr.mxu0 0.0
    %773 = vmatpush1.msra.mxu0 %v758
    %774 = vmatprep.subr.mxu0 0.0
    %775 = vmatpush1.msra.mxu0 %v749
    %776 = vmatprep.subr.mxu0 0.0
    %777 = vmatpush1.msra.mxu0 %v748
    %778 = vmatprep.subr.mxu0 0.0
    %779 = vmatpush1.msra.mxu0 %v747
    %780 = vmatprep.subr.mxu0 0.0
    %781 = vmatpush1.msra.mxu0 %v746
    %782 = vmatprep.subr.mxu0 0.0
    %783 = vmatpush1.msra.mxu0 %v745
    %784 = vmatprep.subr.mxu0 0.0
    %785 = vmatpush1.msra.mxu0 %v744
    %786 = vmatprep.subr.mxu0 0.0
    %787 = vmatpush1.msra.mxu0 %v743
    %788 = vmatprep.subr.mxu0 0.0
    %789 = vmatpush1.msra.mxu0 %v742
    %790 = vmatprep.subr.mxu0 0.0
    %791 = vmatpush1.msra.mxu0 %v741
    %792 = vmatprep.subr.mxu0 0.0
    %793 = vmatpush2.msra.mxu0 0.0
    %794 = vmatprep.subr.mxu0 0.0
    %795 = vmatpush2.msra.mxu0 0.0
    %796 = vmatprep.subr.mxu0 0.0
    %797 = vmatpush2.msra.mxu0 0.0
    %798 = vmatprep.subr.mxu0 0.0
    %799 = vmatpush2.msra.mxu0 0.0
    %800 = vmatprep.subr.mxu0 0.0
    %801 = vmatpush2.msra.mxu0 0.0
    %802 = vmatprep.subr.mxu0 0.0
    %803 = vmatpush2.msra.mxu0 0.0
    %804 = vmatprep.subr.mxu0 0.0
    %805 = vmatpush2.msra.mxu0 0.0
    %806 = vmatprep.subr.mxu0 0.0
    %807 = vmatpush2.msra.mxu0 0.0
    %808 = vmatprep.subr.mxu0 0.0
    %809 = vmatpush2.msra.mxu0 0.0
    %810 = vmatprep.subr.mxu0 0.0
    %811 = vmatpush2.msra.mxu0 0.0
    %812 = vmatprep.subr.mxu0 0.0
    %813 = vmatpush2.msra.mxu0 0.0
    %814 = vmatprep.subr.mxu0 0.0
    %815 = vmatpush2.msra.mxu0 0.0
    %816 = vmatprep.subr.mxu0 0.0
    %817 = vmatpush2.msra.mxu0 0.0
    %818 = vmatprep.subr.mxu0 0.0
    %819 = vmatpush2.msra.mxu0 0.0
    %820 = vmatprep.subr.mxu0 0.0
    %821 = vmatpush2.msra.mxu0 0.0
    %822 = vmatprep.subr.mxu0 0.0
    %823 = vmatpush2.msra.mxu0 0.0
    %824 = vmatprep.mubr.f32.mxu0 0.0
    %825 = vmatmul.mubr.f32.gmra.mxu0 %v752
    %v826 = vpop.f32.mrf.mxu0
    %v827 = vadd.f32 0.0, %v826
    %v828 = vpop.f32.mrf.mxu0
    %829 = vmatprep.mubr.f32.mxu0 0.0
    %830 = vmatmul.mubr.f32.gmra.mxu0 %v755
    %v831 = vpop.f32.mrf.mxu0
    %v832 = vadd.f32 0.0, %v831
    %v833 = vpop.f32.mrf.mxu0
    %834 = vdwg.mxu0
    %v835 = vadd.f32 %v738, %v827
    %v836 = vadd.f32 %v739, %v832
    %s837 = scalar_lea.vmem [#allocation10], 400
    %v838 = vld [vmem:[%s837] sm:$0xff]
    %v839 = vld [vmem:[%s837 + $0x8] sm:$0xff]
    %v840 = vld [vmem:[%s837 + $0x10] sm:$0xff]
    %v841 = vld [vmem:[%s837 + $0x18] sm:$0xff]
    %v842 = vld [vmem:[%s837 + $0x20] sm:$0xff]
    %v843 = vld [vmem:[%s837 + $0x28] sm:$0xff]
    %v844 = vld [vmem:[%s837 + $0x30] sm:$0xff]
    %v845 = vld [vmem:[%s837 + $0x38] sm:$0xff]
    %v846 = vld [vmem:[%s837 + $0x40] sm:$0xff]
    %v847 = vld [vmem:[%s837 + $0x48] sm:$0x7]
    %v849 = vsel %vm361, %v341, 0
    %v852 = vsel %vm361, %v346, 0
    %v855 = vsel %vm368, %v847, 0
    %857 = vmatprep.subr.mxu0 0.0
    %858 = vmatpush1.msra.mxu0 0.0
    %859 = vmatprep.subr.mxu0 0.0
    %860 = vmatpush1.msra.mxu0 0.0
    %861 = vmatprep.subr.mxu0 0.0
    %862 = vmatpush1.msra.mxu0 0.0
    %863 = vmatprep.subr.mxu0 0.0
    %864 = vmatpush1.msra.mxu0 0.0
    %865 = vmatprep.subr.mxu0 0.0
    %866 = vmatpush1.msra.mxu0 0.0
    %867 = vmatprep.subr.mxu0 0.0
    %868 = vmatpush1.msra.mxu0 0.0
    %869 = vmatprep.subr.mxu0 0.0
    %870 = vmatpush1.msra.mxu0 %v855
    %871 = vmatprep.subr.mxu0 0.0
    %872 = vmatpush1.msra.mxu0 %v846
    %873 = vmatprep.subr.mxu0 0.0
    %874 = vmatpush1.msra.mxu0 %v845
    %875 = vmatprep.subr.mxu0 0.0
    %876 = vmatpush1.msra.mxu0 %v844
    %877 = vmatprep.subr.mxu0 0.0
    %878 = vmatpush1.msra.mxu0 %v843
    %879 = vmatprep.subr.mxu0 0.0
    %880 = vmatpush1.msra.mxu0 %v842
    %881 = vmatprep.subr.mxu0 0.0
    %882 = vmatpush1.msra.mxu0 %v841
    %883 = vmatprep.subr.mxu0 0.0
    %884 = vmatpush1.msra.mxu0 %v840
    %885 = vmatprep.subr.mxu0 0.0
    %886 = vmatpush1.msra.mxu0 %v839
    %887 = vmatprep.subr.mxu0 0.0
    %888 = vmatpush1.msra.mxu0 %v838
    %889 = vmatprep.subr.mxu0 0.0
    %890 = vmatpush2.msra.mxu0 0.0
    %891 = vmatprep.subr.mxu0 0.0
    %892 = vmatpush2.msra.mxu0 0.0
    %893 = vmatprep.subr.mxu0 0.0
    %894 = vmatpush2.msra.mxu0 0.0
    %895 = vmatprep.subr.mxu0 0.0
    %896 = vmatpush2.msra.mxu0 0.0
    %897 = vmatprep.subr.mxu0 0.0
    %898 = vmatpush2.msra.mxu0 0.0
    %899 = vmatprep.subr.mxu0 0.0
    %900 = vmatpush2.msra.mxu0 0.0
    %901 = vmatprep.subr.mxu0 0.0
    %902 = vmatpush2.msra.mxu0 0.0
    %903 = vmatprep.subr.mxu0 0.0
    %904 = vmatpush2.msra.mxu0 0.0
    %905 = vmatprep.subr.mxu0 0.0
    %906 = vmatpush2.msra.mxu0 0.0
    %907 = vmatprep.subr.mxu0 0.0
    %908 = vmatpush2.msra.mxu0 0.0
    %909 = vmatprep.subr.mxu0 0.0
    %910 = vmatpush2.msra.mxu0 0.0
    %911 = vmatprep.subr.mxu0 0.0
    %912 = vmatpush2.msra.mxu0 0.0
    %913 = vmatprep.subr.mxu0 0.0
    %914 = vmatpush2.msra.mxu0 0.0
    %915 = vmatprep.subr.mxu0 0.0
    %916 = vmatpush2.msra.mxu0 0.0
    %917 = vmatprep.subr.mxu0 0.0
    %918 = vmatpush2.msra.mxu0 0.0
    %919 = vmatprep.subr.mxu0 0.0
    %920 = vmatpush2.msra.mxu0 0.0
    %921 = vmatprep.mubr.f32.mxu0 0.0
    %922 = vmatmul.mubr.f32.gmra.mxu0 %v849
    %v923 = vpop.f32.mrf.mxu0
    %v924 = vadd.f32 0.0, %v923
    %v925 = vpop.f32.mrf.mxu0
    %926 = vmatprep.mubr.f32.mxu0 0.0
    %927 = vmatmul.mubr.f32.gmra.mxu0 %v852
    %v928 = vpop.f32.mrf.mxu0
    %v929 = vadd.f32 0.0, %v928
    %v930 = vpop.f32.mrf.mxu0
    %931 = vdwg.mxu0
    %v932 = vadd.f32 %v835, %v924
    %v933 = vadd.f32 %v836, %v929
    %vm934 = vcmask 609280
    %935 = vst.msk [vmem:[#allocation13] sm:$0xf] %vm934, %v932
    %s936 = scalar_lea.vmem [#allocation13], 4
    %937 = vst.msk [vmem:[%s936] sm:$0xf] %vm934, %v933
    // Predicated region
    $region50: #{model_forward.1} parent=1 // pred_check
      _
    $region51: #{model_forward.1} parent=1 // pred_check_branch
      %939 = sbr.rel (0) target = $region53
    $region52: #{model_forward.1} parent=1 // pred_region
      %s941 = ssub.s32 128, 128
      %942 = vsyncadd [#allocation4], %s941
      %s943 = sshll.u32 [#allocation13], 4
      %s944 = int_to_ptr.vmem [resolvable:$true] %s943
      %949 = dma.vmem_to_hbm [thread:$0]  %s944, 128, %s6, [#allocation4], 64, 64, 4
    $region53: #{model_forward.1} parent=1 // pred_fallthru
      _
    // Predicated region
    $region54: #{model_forward.1} parent=1 // pred_check
      _
    $region55: #{model_forward.1} parent=1 // pred_check_branch
      %951 = sbr.rel (0) target = $region57
    $region56: #{model_forward.1} parent=1 // pred_region
      %952 = dma.done [#allocation4], 128
    $region57: #{model_forward.1} parent=1 // pred_fallthru
      _
    %953 = vsyncpa [#allocation3], 1
    %954 = vsyncpa [#allocation6], 1
    %955 = vsyncpa [#allocation9], 1
    %956 = vsyncpa [#allocation12], 1
    %957 = vsyncpa [#allocation4], 1

</llo_original>
